<compile_context>
chip_gen: v6e
topology: v6e:2x2x1
jax: 0.10.0
libtpu: 0.0.40
codegen_flags: <defaults>
</compile_context>

<pallas_src>
import functools
import jax
import jax.numpy as jnp
from jax.experimental import pallas as pl
from jax.experimental.pallas import tpu as pltpu

F_PAD = 128    # lane-dense hidden width (h_feats <= 128)
CLS_PAD = 128  # lane-dense classifier width


def _round_up(n, m):
    return ((n + m - 1) // m) * m


def _pad_2d(a, rows, cols, dtype):
    buf = jnp.zeros((rows, cols), dtype)
    return buf.at[: a.shape[0], : a.shape[1]].set(a.astype(dtype))


def _pad_1d(a, cols):
    buf = jnp.zeros((cols,), jnp.float32)
    return buf.at[: a.shape[0]].set(a.astype(jnp.float32))


def _vmem_budget_bytes():
    """Per-generation VMEM budget (v5e/v6e: 128 MiB physical, v7x: 64 MiB per TC)."""
    try:
        info = pltpu.get_tpu_info()
        cap = int(getattr(info, "vmem_capacity_bytes", 64 << 20))
    except Exception:
        cap = 64 << 20
    return max(16 << 20, min(int(cap * 0.7), 100 << 20))


def _choose_tiles(n_dst, n_src, budget):
    """Pick MXU-aligned (multiple-of-128) tiles that fit the VMEM budget."""
    m_cap = _round_up(max(n_dst, 1), 128)
    k_cap = _round_up(max(n_src, 1), 128)

    tile_m = 128
    for cand in (512, 256, 128):
        if cand <= m_cap:
            tile_m = cand
            break
    # prefer >= 2 row tiles so the 'parallel' axis can shard across TensorCores (v7x megacore)
    if m_cap > 128 and (m_cap + tile_m - 1) // tile_m < 2 and tile_m > 128:
        tile_m //= 2

    def footprint(tm, tk):
        return (2 * tm * tk * 2            # A   (bf16, double-buffered)
                + 2 * tk * F_PAD * 2       # XW  (bf16, double-buffered)
                + 2 * tm * F_PAD * 4       # out (generous)
                + tm * F_PAD * 4           # f32 accumulator scratch
                + (2 << 20))               # headroom (bias / classifier / misc)

    tile_k = 128
    for cand in (2048, 1024, 512, 256, 128):
        if cand <= k_cap and footprint(tile_m, cand) <= budget:
            tile_k = cand
            break
    return tile_m, tile_k


# ---------------- Pallas kernels ----------------

def _accumulate(a_ref, xw_ref, acc_ref):
    """acc += A_norm_tile @ XW_tile  (bf16 MXU inputs, f32 accumulation)."""
    rr, kk = pl.program_id(1), pl.program_id(2)

    @pl.when(jnp.logical_and(rr == 0, kk == 0))
    def _():
        acc_ref[...] = jnp.zeros_like(acc_ref)

    acc_ref[...] += jnp.dot(a_ref[...], xw_ref[...],
                            preferred_element_type=jnp.float32)


def _is_final_step():
    return jnp.logical_and(pl.program_id(1) == pl.num_programs(1) - 1,
                           pl.program_id(2) == pl.num_programs(2) - 1)


def _rgcn_hidden_kernel(a_ref, xw_ref, mb_ref, o_ref, acc_ref, *, inv_r, apply_relu):
    _accumulate(a_ref, xw_ref, acc_ref)

    @pl.when(_is_final_step())
    def _():
        h = acc_ref[...] * inv_r + mb_ref[...]          # mean over relations + folded mean-bias
        if apply_relu:
            h = jnp.maximum(h, 0.0)
        o_ref[...] = h.astype(o_ref.dtype)


def _rgcn_last_kernel(a_ref, xw_ref, mb_ref, wc_ref, bc_ref, o_ref, acc_ref, *, inv_r):
    _accumulate(a_ref, xw_ref, acc_ref)

    @pl.when(_is_final_step())
    def _():
        h = acc_ref[...] * inv_r + mb_ref[...]
        logits = jnp.dot(h.astype(wc_ref.dtype), wc_ref[...],
                         preferred_element_type=jnp.float32) + bc_ref[...]
        o_ref[...] = logits.astype(o_ref.dtype)


def fused_rgcn_hidden(a_stack, xw_stack, mean_b, *, tile_m, tile_k, apply_relu, vmem_limit):
    r, n_dst_pad, n_src_pad = a_stack.shape
    f_out = xw_stack.shape[2]
    kern = functools.partial(_rgcn_hidden_kernel, inv_r=1.0 / r, apply_relu=apply_relu)
    return pl.pallas_call(
        kern,
        out_shape=jax.ShapeDtypeStruct((n_dst_pad, f_out), jnp.bfloat16),
        grid_spec=pltpu.PrefetchScalarGridSpec(
            num_scalar_prefetch=0,
            grid=(n_dst_pad // tile_m, r, n_src_pad // tile_k),
            in_specs=[
                pl.BlockSpec((None, tile_m, tile_k), lambda i, rr, kk: (rr, i, kk)),
                pl.BlockSpec((None, tile_k, f_out), lambda i, rr, kk: (rr, kk, 0)),
                pl.BlockSpec((1, f_out), lambda i, rr, kk: (0, 0)),
            ],
            out_specs=pl.BlockSpec((tile_m, f_out), lambda i, rr, kk: (i, 0)),
            scratch_shapes=[pltpu.VMEM((tile_m, f_out), jnp.float32)],
        ),
        compiler_params=pltpu.CompilerParams(
            dimension_semantics=("parallel", "arbitrary", "arbitrary"),
            vmem_limit_bytes=int(vmem_limit)),
    )(a_stack, xw_stack, mean_b)


def fused_rgcn_last(a_stack, xw_stack, mean_b, w_cls, b_cls, *, tile_m, tile_k, vmem_limit):
    r, n_dst_pad, n_src_pad = a_stack.shape
    f_out = xw_stack.shape[2]
    n_cls = w_cls.shape[1]
    kern = functools.partial(_rgcn_last_kernel, inv_r=1.0 / r)
    return pl.pallas_call(
        kern,
        out_shape=jax.ShapeDtypeStruct((n_dst_pad, n_cls), jnp.float32),
        grid_spec=pltpu.PrefetchScalarGridSpec(
            num_scalar_prefetch=0,
            grid=(n_dst_pad // tile_m, r, n_src_pad // tile_k),
            in_specs=[
                pl.BlockSpec((None, tile_m, tile_k), lambda i, rr, kk: (rr, i, kk)),
                pl.BlockSpec((None, tile_k, f_out), lambda i, rr, kk: (rr, kk, 0)),
                pl.BlockSpec((1, f_out), lambda i, rr, kk: (0, 0)),
                pl.BlockSpec((f_out, n_cls), lambda i, rr, kk: (0, 0)),
                pl.BlockSpec((1, n_cls), lambda i, rr, kk: (0, 0)),
            ],
            out_specs=pl.BlockSpec((tile_m, n_cls), lambda i, rr, kk: (i, 0)),
            scratch_shapes=[pltpu.VMEM((tile_m, f_out), jnp.float32)],
        ),
        compiler_params=pltpu.CompilerParams(
            dimension_semantics=("parallel", "arbitrary", "arbitrary"),
            vmem_limit_bytes=int(vmem_limit)),
    )(a_stack, xw_stack, mean_b, w_cls, b_cls)


# ---------------- static per-graph preprocessing (hoisted out of forward) ----------------

def prepare_graph(blocks, canonical_etypes, num_nodes, src_feat_types, budget):
    """Pad + stack normalized adjacencies once per graph, choose tiles per (layer, dst_type)."""
    all_dst = sorted({d for (_, _, d) in canonical_etypes})
    num_layers = len(blocks)
    prepared = []
    feat_types = set(src_feat_types)
    for l in range(num_layers):
        last = l == num_layers - 1
        dst_types = ["paper"] if last else all_dst
        layer_prep = {}
        for dst_t in dst_types:
            rels = [(s, e) for (s, e, d) in canonical_etypes if d == dst_t and s in feat_types]
            if not rels:
                continue
            n_dst = num_nodes[dst_t]
            n_src_max = max(num_nodes[s] for s, _ in rels)
            tile_m, tile_k = _choose_tiles(n_dst, n_src_max, budget)
            n_dst_pad = _round_up(n_dst, tile_m)
            n_src_pad = _round_up(n_src_max, tile_k)
            a_stack = jnp.stack([
                _pad_2d(blocks[l][(s, e, dst_t)], n_dst_pad, n_src_pad, jnp.bfloat16)
                for s, e in rels])
            layer_prep[dst_t] = dict(rels=rels, a_stack=a_stack, tile_m=tile_m,
                                     tile_k=tile_k, n_dst=n_dst, n_src_pad=n_src_pad)
        prepared.append(layer_prep)
        feat_types = set(layer_prep.keys())
    return prepared


# ---------------- RGCN forward ----------------

def rgcn_forward(prepared, x, params, num_nodes, in_feats, h_feats, num_classes, vmem_limit):
    num_layers = len(prepared)
    h = {t: v for t, v in x.items()}     # real-shape features (bf16 padded after layer 0)

    for l in range(num_layers):
        layer_p = params["layers"][l]
        last = l == num_layers - 1
        f_in = in_feats if l == 0 else h_feats
        new_h = {}
        for dst_t, prep in prepared[l].items():
            rels, n_src_pad = prep["rels"], prep["n_src_pad"]

            # Precompute per-relation XW (tiny GEMM) outside the kernel; stream only A and XW.
            xw_list = []
            for s, e in rels:
                w, _ = layer_p[e]
                xs = h[s][: num_nodes[s], :f_in].astype(jnp.bfloat16)
                xw = jnp.dot(xs, w.astype(jnp.bfloat16),
                             preferred_element_type=jnp.float32)
                xw_list.append(_pad_2d(xw, n_src_pad, F_PAD, jnp.bfloat16))
            xw_stack = jnp.stack(xw_list)

            # mean_r(y_r + b_r) == mean_r(y_r) + mean_r(b_r): fold biases into finalize
            mean_b = jnp.mean(
                jnp.stack([_pad_1d(layer_p[e][1], F_PAD) for _, e in rels]),
                axis=0).reshape(1, F_PAD)

            if last:
                w_cls = _pad_2d(params["linear"]["w"], F_PAD, CLS_PAD, jnp.bfloat16)
                b_cls = _pad_1d(params["linear"]["b"], CLS_PAD).reshape(1, CLS_PAD)
                logits = fused_rgcn_last(prep["a_stack"], xw_stack, mean_b, w_cls, b_cls,
                                         tile_m=prep["tile_m"], tile_k=prep["tile_k"],
                                         vmem_limit=vmem_limit)
                return logits[: prep["n_dst"], :num_classes]

            y = fused_rgcn_hidden(prep["a_stack"], xw_stack, mean_b,
                                  tile_m=prep["tile_m"], tile_k=prep["tile_k"],
                                  apply_relu=True, vmem_limit=vmem_limit)
            new_h[dst_t] = y      # bf16, padded rows kept (zero A columns make them harmless)
            # dropout: identity (eval mode)
        h = new_h
    raise ValueError("no relations target 'paper' in the last block")


# ---------------- pure-JAX reference (f32) ----------------

def rgcn_reference(blocks, x, params, canonical_etypes, num_nodes,
                   in_feats, h_feats, num_classes):
    h = {t: v.astype(jnp.float32) for t, v in x.items()}
    num_layers = len(blocks)
    all_dst = sorted({d for (_, _, d) in canonical_etypes})
    for l in range(num_layers):
        layer_p = params["layers"][l]
        last = l == num_layers - 1
        new_h = {}
        for dst_t in all_dst:
            ys = []
            for (s, e, d) in canonical_etypes:
                if d != dst_t or s not in h:
                    continue
                w, b = layer_p[e]
                ys.append(blocks[l][(s, e, dst_t)] @ (h[s] @ w) + b)
            if not ys:
                continue
            y = jnp.mean(jnp.stack(ys), axis=0)
            if not last:
                y = jnp.maximum(y, 0.0)
            new_h[dst_t] = y
        h = new_h
    return h["paper"] @ params["linear"]["w"] + params["linear"]["b"]


# ---------------- deterministic setup ----------------

def xavier_uniform(key, shape):
    fan_in, fan_out = shape
    bound = jnp.sqrt(6.0 / (fan_in + fan_out))
    return jax.random.uniform(key, shape, jnp.float32, -bound, bound)


def make_norm_adj(key, n_dst, n_src, p=0.3):
    e = (jax.random.uniform(key, (n_dst, n_src)) < p).astype(jnp.float32)
    out_deg = jnp.maximum(e.sum(axis=0), 1.0)   # src out-degrees
    in_deg = jnp.maximum(e.sum(axis=1), 1.0)    # dst in-degrees
    return e * (1.0 / jnp.sqrt(in_deg))[:, None] * (1.0 / jnp.sqrt(out_deg))[None, :]


if __name__ == "__main__":
    key = jax.random.PRNGKey(0)

    # small heterogeneous graph
    N = {"paper": 32, "author": 16}
    canonical_etypes = [
        ("paper", "cites", "paper"),
        ("author", "writes", "paper"),
        ("paper", "written_by", "author"),
    ]
    etypes = [et for (_, et, _) in canonical_etypes]

    in_feats, h_feats, num_classes, num_layers = 16, 32, 8, 2

    # blocks: one dict of dense normalized adjacencies per layer
    blocks = []
    for _ in range(num_layers):
        blk = {}
        for (src_t, et, dst_t) in canonical_etypes:
            key, k = jax.random.split(key)
            blk[(src_t, et, dst_t)] = make_norm_adj(k, N[dst_t], N[src_t])
        blocks.append(blk)

    # parameters (deterministic init; DGL GraphConv: xavier weight, zero bias)
    params = {"layers": [], "linear": {}}
    for l in range(num_layers):
        fin = in_feats if l == 0 else h_feats
        layer_p = {}
        for et in etypes:
            key, k = jax.random.split(key)
            layer_p[et] = (xavier_uniform(k, (fin, h_feats)),
                           jnp.zeros((h_feats,), jnp.float32))
        params["layers"].append(layer_p)
    key, kw, kb = jax.random.split(key, 3)
    params["linear"]["w"] = xavier_uniform(kw, (h_feats, num_classes))
    params["linear"]["b"] = jax.random.uniform(
        kb, (num_classes,), jnp.float32,
        -1.0 / jnp.sqrt(h_feats), 1.0 / jnp.sqrt(h_feats))

    # input node features per src node type
    key, kp, ka = jax.random.split(key, 3)
    x = {
        "paper": jax.random.normal(kp, (N["paper"], in_feats), jnp.float32),
        "author": jax.random.normal(ka, (N["author"], in_feats), jnp.float32),
    }

    budget = _vmem_budget_bytes()
    prepared = prepare_graph(blocks, canonical_etypes, N, set(x.keys()), budget)

    out = rgcn_forward(prepared, x, params, N, in_feats, h_feats, num_classes, budget)
    out = jax.block_until_ready(out)
    assert out.shape == (N["paper"], num_classes), out.shape

    ref = rgcn_reference(blocks, x, params, canonical_etypes, N,
                         in_feats, h_feats, num_classes)
    max_err = float(jnp.max(jnp.abs(out - ref)))
    assert max_err < 0.1, f"max abs error vs f32 reference: {max_err}"

    print("KERNEL_OK")
</pallas_src>

<mosaic_0001>
module attributes {stable_mosaic.version = 11 : i64} {
  func.func @_rgcn_hidden_kernel(%arg0: i32, %arg1: i32, %arg2: i32, %arg3: memref<1x128x128xbf16, #tpu.memory_space<vmem>>, %arg4: memref<1x128x128xbf16, #tpu.memory_space<vmem>>, %arg5: memref<1x128xf32, #tpu.memory_space<vmem>>, %arg6: memref<128x128xbf16, #tpu.memory_space<vmem>>, %arg7: memref<128x128xf32, #tpu.memory_space<vmem>>) attributes {dimension_semantics = [#tpu.dimension_semantics<parallel>, #tpu.dimension_semantics<arbitrary>, #tpu.dimension_semantics<arbitrary>], iteration_bounds = array<i64: 1, 1, 1>, scalar_prefetch = 0 : i64, scratch_operands = 1 : i64, tpu.core_type = #tpu.core_type<tc>, window_params = [{transform_indices = @transform_0, window_bounds = array<i64: 1, 128, 128>}, {transform_indices = @transform_1, window_bounds = array<i64: 1, 128, 128>}, {pipeline_mode = #tpu.pipeline_mode<synchronous>, transform_indices = @transform_2, window_bounds = array<i64: 1, 128>}, {transform_indices = @transform_3, window_bounds = array<i64: 128, 128>}]} {
    %c0_i32 = arith.constant 0 : i32
    %0 = arith.cmpi eq, %arg1, %c0_i32 : i32
    %c0_i32_0 = arith.constant 0 : i32
    %1 = arith.cmpi eq, %arg2, %c0_i32_0 : i32
    %2 = arith.andi %0, %1 : i1
    %3 = arith.extui %2 : i1 to i32
    %c0_i32_1 = arith.constant 0 : i32
    %4 = arith.cmpi ne, %3, %c0_i32_1 : i32
    scf.if %4 {
      %cst_14 = arith.constant 0.000000e+00 : f32
      %18 = vector.broadcast %cst_14 : f32 to vector<128x128xf32>
      %c0_15 = arith.constant 0 : index
      %c0_16 = arith.constant 0 : index
      %19 = vector.load %arg7[%c0_15, %c0_16] : memref<128x128xf32, #tpu.memory_space<vmem>>, vector<128x128xf32>
      tpu.vector_store %arg7[%c0_15, %c0_16], %18 {strides = array<i32>} : memref<128x128xf32, #tpu.memory_space<vmem>>, vector<128x128xf32>,
    } else {
    }
    %c0 = arith.constant 0 : index
    %c0_2 = arith.constant 0 : index
    %5 = vector.load %arg7[%c0, %c0_2] : memref<128x128xf32, #tpu.memory_space<vmem>>, vector<128x128xf32>
    %c0_3 = arith.constant 0 : index
    %c0_4 = arith.constant 0 : index
    %c0_5 = arith.constant 0 : index
    %6 = vector.load %arg3[%c0_3, %c0_4, %c0_5] : memref<1x128x128xbf16, #tpu.memory_space<vmem>>, vector<1x128x128xbf16>
    %7 = vector.shape_cast %6 : vector<1x128x128xbf16> to vector<128x128xbf16>
    %c0_6 = arith.constant 0 : index
    %c0_7 = arith.constant 0 : index
    %c0_8 = arith.constant 0 : index
    %8 = vector.load %arg4[%c0_6, %c0_7, %c0_8] : memref<1x128x128xbf16, #tpu.memory_space<vmem>>, vector<1x128x128xbf16>
    %9 = vector.shape_cast %8 : vector<1x128x128xbf16> to vector<128x128xbf16>
    %cst = arith.constant dense<0.000000e+00> : vector<128x128xf32>
    %10 = tpu.matmul %7, %9, %cst {dimension_numbers = #tpu.dot_dimension_numbers<[1], [0], [0], [1], [0, 0, 1, 1], [], []>} : vector<128x128xbf16>, vector<128x128xbf16>, vector<128x128xf32> -> vector<128x128xf32>
    %11 = arith.addf %5, %10 : vector<128x128xf32>
    %c0_9 = arith.constant 0 : index
    %c0_10 = arith.constant 0 : index
    %12 = vector.load %arg7[%c0_9, %c0_10] : memref<128x128xf32, #tpu.memory_space<vmem>>, vector<128x128xf32>
    tpu.vector_store %arg7[%c0_9, %c0_10], %11 {strides = array<i32>} : memref<128x128xf32, #tpu.memory_space<vmem>>, vector<128x128xf32>,
    %c0_i32_11 = arith.constant 0 : i32
    %13 = arith.cmpi eq, %arg1, %c0_i32_11 : i32
    %c0_i32_12 = arith.constant 0 : i32
    %14 = arith.cmpi eq, %arg2, %c0_i32_12 : i32
    %15 = arith.andi %13, %14 : i1
    %16 = arith.extui %15 : i1 to i32
    %c0_i32_13 = arith.constant 0 : i32
    %17 = arith.cmpi ne, %16, %c0_i32_13 : i32
    scf.if %17 {
      %c0_14 = arith.constant 0 : index
      %c0_15 = arith.constant 0 : index
      %18 = vector.load %arg7[%c0_14, %c0_15] : memref<128x128xf32, #tpu.memory_space<vmem>>, vector<128x128xf32>
      %cst_16 = arith.constant 1.000000e+00 : f32
      %19 = vector.broadcast %cst_16 : f32 to vector<128x128xf32>
      %20 = arith.mulf %18, %19 : vector<128x128xf32>
      %c0_17 = arith.constant 0 : index
      %c0_18 = arith.constant 0 : index
      %21 = vector.load %arg5[%c0_17, %c0_18] : memref<1x128xf32, #tpu.memory_space<vmem>>, vector<1x128xf32>
      %22 = vector.broadcast %21 : vector<1x128xf32> to vector<128x128xf32>
      %23 = arith.addf %20, %22 : vector<128x128xf32>
      %cst_19 = arith.constant 0.000000e+00 : f32
      %24 = vector.broadcast %cst_19 : f32 to vector<128x128xf32>
      %25 = arith.maximumf %23, %24 : vector<128x128xf32>
      %26 = arith.truncf %25 : vector<128x128xf32> to vector<128x128xbf16>
      %c0_20 = arith.constant 0 : index
      %c0_21 = arith.constant 0 : index
      %27 = vector.load %arg6[%c0_20, %c0_21] : memref<128x128xbf16, #tpu.memory_space<vmem>>, vector<128x128xbf16>
      tpu.vector_store %arg6[%c0_20, %c0_21], %26 {strides = array<i32>} : memref<128x128xbf16, #tpu.memory_space<vmem>>, vector<128x128xbf16>,
    } else {
    }
    return
  }
  func.func @transform_0(%arg0: i32, %arg1: i32, %arg2: i32) -> (i32, i32, i32) {
    %c0_i32 = arith.constant 0 : i32
    return %arg1, %arg0, %arg2 : i32, i32, i32
  }
  func.func @transform_1(%arg0: i32, %arg1: i32, %arg2: i32) -> (i32, i32, i32) {
    %c0_i32 = arith.constant 0 : i32
    %c0_i32_0 = arith.constant 0 : i32
    return %arg1, %arg2, %c0_i32 : i32, i32, i32
  }
  func.func @transform_2(%arg0: i32, %arg1: i32, %arg2: i32) -> (i32, i32) {
    %c0_i32 = arith.constant 0 : i32
    %c0_i32_0 = arith.constant 0 : i32
    %c0_i32_1 = arith.constant 0 : i32
    return %c0_i32, %c0_i32_0 : i32, i32
  }
  func.func @transform_3(%arg0: i32, %arg1: i32, %arg2: i32) -> (i32, i32) {
    %c0_i32 = arith.constant 0 : i32
    %c0_i32_0 = arith.constant 0 : i32
    return %arg0, %c0_i32 : i32, i32
  }
}

</mosaic_0001>

<llo_original>
// kernel: tpu_custom_call.1
$region0: #{tpu_custom_call.1}
  #allocation0 [shape = 'u32[]', space=smem, size = 0x4, offset = 0x4, fixed_abs, tag = 'smem constant byte address 0x4 - core index']
  #allocation1 [shape = 'u32[144,128]{1,0:T(1,128)}', space=vmem, size = 0x12000, scoped, tag = 'internal scratch']
  #allocation2 [shape = 'f32[128,128]{1,0:T(8,128)}', space=vmem, size = 0x10000, scoped, tag = 'scratch operand']
  %s0 = inlined_call_operand.hbm [shape: bf16[1,128,128], index: 0, kind: input, shape index: {}]
  %s1 = inlined_call_operand.hbm [shape: bf16[1,128,128], index: 1, kind: input, shape index: {}]
  %s2 = inlined_call_operand.vmem [shape: f32[1,128], index: 2, kind: input, shape index: {}]
  %s3 = inlined_call_operand.hbm [shape: bf16[128,128], index: 3, kind: output, shape index: {}]
  %s4 = sld [smem:[#allocation0]]
  $region38: #{tpu_custom_call.1} parent=0
    _
  %s6 = ssub.s32 1, %s4
  %s7 = scalar_select 0, %s6, %s4
  $region1: #{tpu_custom_call.1} parent=0
    #allocation3 [shape = 'u8[32768]{0}', space=vmem, size = 0x8000, scoped, tag = 'input window, operand 0, single buffered']
    #allocation4 [shape = 's32[1]{0}', space=sflag, size = 0x4, scoped, tag = 'scoped memory for tpu_custom_call.1']
    #allocation5 [shape = 's32[1]{0}', space=sflag, size = 0x4, scoped, tag = 'scoped memory for tpu_custom_call.1']
    #allocation6 [shape = 'u8[32768]{0}', space=vmem, size = 0x8000, scoped, tag = 'input window, operand 1, single buffered']
    #allocation7 [shape = 's32[1]{0}', space=sflag, size = 0x4, scoped, tag = 'scoped memory for tpu_custom_call.1']
    #allocation8 [shape = 'u8[32768]{0}', space=vmem, size = 0x8000, scoped, tag = 'output window, operand 0, single buffered']
    %8 = vsyncpa [#allocation4], 0
    %9 = vsyncpa [#allocation7], 0
    %10 = vsyncpa [#allocation5], 0
    // Predicated region
    $region2: #{tpu_custom_call.1} parent=1 // pred_check
      _
    $region3: #{tpu_custom_call.1} parent=1 // pred_check_branch
      %12 = sbr.rel (0) target = $region5
    $region4: #{tpu_custom_call.1} parent=1 // pred_region
      %s14 = ssub.s32 1024, 1024
      %15 = vsyncadd [#allocation4], %s14
      %s16 = sshll.u32 [#allocation3], 4
      %s17 = int_to_ptr.vmem [resolvable:$true] %s16
      %22 = dma.hbm_to_vmem [thread:$0]  %s0, 1024, %s17, [#allocation4], 64, 64, 4
    $region5: #{tpu_custom_call.1} parent=1 // pred_fallthru
      _
    // Predicated region
    $region6: #{tpu_custom_call.1} parent=1 // pred_check
      _
    $region7: #{tpu_custom_call.1} parent=1 // pred_check_branch
      %24 = sbr.rel (0) target = $region9
    $region8: #{tpu_custom_call.1} parent=1 // pred_region
      %s26 = ssub.s32 1024, 1024
      %27 = vsyncadd [#allocation7], %s26
      %s28 = sshll.u32 [#allocation6], 4
      %s29 = int_to_ptr.vmem [resolvable:$true] %s28
      %34 = dma.hbm_to_vmem [thread:$0]  %s1, 1024, %s29, [#allocation7], 64, 64, 4
    $region9: #{tpu_custom_call.1} parent=1 // pred_fallthru
      _
    // Predicated region
    $region10: #{tpu_custom_call.1} parent=1 // pred_check
      _
    $region11: #{tpu_custom_call.1} parent=1 // pred_check_branch
      %36 = sbr.rel (0) target = $region13
    $region12: #{tpu_custom_call.1} parent=1 // pred_region
      _
    $region13: #{tpu_custom_call.1} parent=1 // pred_fallthru
      _
    // Predicated region
    $region14: #{tpu_custom_call.1} parent=1 // pred_check
      _
    $region15: #{tpu_custom_call.1} parent=1 // pred_check_branch
      %38 = sbr.rel (0) target = $region17
    $region16: #{tpu_custom_call.1} parent=1 // pred_region
      %39 = dma.done [#allocation4], 1024
    $region17: #{tpu_custom_call.1} parent=1 // pred_fallthru
      _
    // Predicated region
    $region18: #{tpu_custom_call.1} parent=1 // pred_check
      _
    $region19: #{tpu_custom_call.1} parent=1 // pred_check_branch
      %41 = sbr.rel (0) target = $region21
    $region20: #{tpu_custom_call.1} parent=1 // pred_region
      %42 = dma.done [#allocation7], 1024
    $region21: #{tpu_custom_call.1} parent=1 // pred_fallthru
      _
    %p44 = scmp.eq.s32.totalorder 0, 0
    %p45 = scmp.eq.s32.totalorder 0, 0
    %p46 = pnand %p44, %p45
    %p47 = pneg %p46
    // Predicated region
    $region22: #{tpu_custom_call.1} parent=1 // pred_check
      _
    $region23: #{tpu_custom_call.1} parent=1 // pred_check_branch
      %49 = sbr.rel (%p46) target = $region25
    $region24: #{tpu_custom_call.1} parent=1 // pred_region
      %50 = vst [vmem:[#allocation2] sm:$0xff] 0.0
      %51 = vst [vmem:[#allocation2 + $0x8] sm:$0xff] 0.0
      %52 = vst [vmem:[#allocation2 + $0x10] sm:$0xff] 0.0
      %53 = vst [vmem:[#allocation2 + $0x18] sm:$0xff] 0.0
      %54 = vst [vmem:[#allocation2 + $0x20] sm:$0xff] 0.0
      %55 = vst [vmem:[#allocation2 + $0x28] sm:$0xff] 0.0
      %56 = vst [vmem:[#allocation2 + $0x30] sm:$0xff] 0.0
      %57 = vst [vmem:[#allocation2 + $0x38] sm:$0xff] 0.0
      %58 = vst [vmem:[#allocation2 + $0x40] sm:$0xff] 0.0
      %59 = vst [vmem:[#allocation2 + $0x48] sm:$0xff] 0.0
      %60 = vst [vmem:[#allocation2 + $0x50] sm:$0xff] 0.0
      %61 = vst [vmem:[#allocation2 + $0x58] sm:$0xff] 0.0
      %62 = vst [vmem:[#allocation2 + $0x60] sm:$0xff] 0.0
      %63 = vst [vmem:[#allocation2 + $0x68] sm:$0xff] 0.0
      %64 = vst [vmem:[#allocation2 + $0x70] sm:$0xff] 0.0
      %65 = vst [vmem:[#allocation2 + $0x78] sm:$0xff] 0.0
    $region25: #{tpu_custom_call.1} parent=1 // pred_fallthru
      _
    %v66 = vld [vmem:[#allocation2] sm:$0xff]
    %v67 = vld [vmem:[#allocation2 + $0x8] sm:$0xff]
    %v68 = vld [vmem:[#allocation2 + $0x10] sm:$0xff]
    %v69 = vld [vmem:[#allocation2 + $0x18] sm:$0xff]
    %v70 = vld [vmem:[#allocation2 + $0x20] sm:$0xff]
    %v71 = vld [vmem:[#allocation2 + $0x28] sm:$0xff]
    %v72 = vld [vmem:[#allocation2 + $0x30] sm:$0xff]
    %v73 = vld [vmem:[#allocation2 + $0x38] sm:$0xff]
    %v74 = vld [vmem:[#allocation2 + $0x40] sm:$0xff]
    %v75 = vld [vmem:[#allocation2 + $0x48] sm:$0xff]
    %v76 = vld [vmem:[#allocation2 + $0x50] sm:$0xff]
    %v77 = vld [vmem:[#allocation2 + $0x58] sm:$0xff]
    %v78 = vld [vmem:[#allocation2 + $0x60] sm:$0xff]
    %v79 = vld [vmem:[#allocation2 + $0x68] sm:$0xff]
    %v80 = vld [vmem:[#allocation2 + $0x70] sm:$0xff]
    %v81 = vld [vmem:[#allocation2 + $0x78] sm:$0xff]
    %v82 = vld [vmem:[#allocation3] sm:$0xf]
    %v83 = vld [vmem:[#allocation3 + $0x4] sm:$0xf]
    %v84 = vld [vmem:[#allocation3 + $0x8] sm:$0xf]
    %v85 = vld [vmem:[#allocation3 + $0xc] sm:$0xf]
    %v86 = vld [vmem:[#allocation3 + $0x10] sm:$0xf]
    %v87 = vld [vmem:[#allocation3 + $0x14] sm:$0xf]
    %v88 = vld [vmem:[#allocation3 + $0x18] sm:$0xf]
    %v89 = vld [vmem:[#allocation3 + $0x1c] sm:$0xf]
    %v90 = vld [vmem:[#allocation3 + $0x20] sm:$0xf]
    %v91 = vld [vmem:[#allocation3 + $0x24] sm:$0xf]
    %v92 = vld [vmem:[#allocation3 + $0x28] sm:$0xf]
    %v93 = vld [vmem:[#allocation3 + $0x2c] sm:$0xf]
    %v94 = vld [vmem:[#allocation3 + $0x30] sm:$0xf]
    %v95 = vld [vmem:[#allocation3 + $0x34] sm:$0xf]
    %v96 = vld [vmem:[#allocation3 + $0x38] sm:$0xf]
    %v97 = vld [vmem:[#allocation3 + $0x3c] sm:$0xf]
    %v98 = vld [vmem:[#allocation6] sm:$0xf]
    %v99 = vld [vmem:[#allocation6 + $0x4] sm:$0xf]
    %v100 = vld [vmem:[#allocation6 + $0x8] sm:$0xf]
    %v101 = vld [vmem:[#allocation6 + $0xc] sm:$0xf]
    %v102 = vld [vmem:[#allocation6 + $0x10] sm:$0xf]
    %v103 = vld [vmem:[#allocation6 + $0x14] sm:$0xf]
    %v104 = vld [vmem:[#allocation6 + $0x18] sm:$0xf]
    %v105 = vld [vmem:[#allocation6 + $0x1c] sm:$0xf]
    %v106 = vld [vmem:[#allocation6 + $0x20] sm:$0xf]
    %v107 = vld [vmem:[#allocation6 + $0x24] sm:$0xf]
    %v108 = vld [vmem:[#allocation6 + $0x28] sm:$0xf]
    %v109 = vld [vmem:[#allocation6 + $0x2c] sm:$0xf]
    %v110 = vld [vmem:[#allocation6 + $0x30] sm:$0xf]
    %v111 = vld [vmem:[#allocation6 + $0x34] sm:$0xf]
    %v112 = vld [vmem:[#allocation6 + $0x38] sm:$0xf]
    %v113 = vld [vmem:[#allocation6 + $0x3c] sm:$0xf]
    %v130 = vunpack.c.l.b16 %v82
    %v131 = vunpack.c.l.b16 %v83
    %v132 = vunpack.c.l.b16 %v84
    %v133 = vunpack.c.l.b16 %v85
    %v134 = vunpack.c.l.b16 %v86
    %v135 = vunpack.c.l.b16 %v87
    %v136 = vunpack.c.l.b16 %v88
    %v137 = vunpack.c.l.b16 %v89
    %v138 = vunpack.c.l.b16 %v90
    %v139 = vunpack.c.l.b16 %v91
    %v140 = vunpack.c.l.b16 %v92
    %v141 = vunpack.c.l.b16 %v93
    %v142 = vunpack.c.l.b16 %v94
    %v143 = vunpack.c.l.b16 %v95
    %v144 = vunpack.c.l.b16 %v96
    %v145 = vunpack.c.l.b16 %v97
    %v146 = vpack.c.b16 %v131, %v130
    %v147 = vpack.c.b16 %v133, %v132
    %v148 = vpack.c.b16 %v135, %v134
    %v149 = vpack.c.b16 %v137, %v136
    %v150 = vpack.c.b16 %v139, %v138
    %v151 = vpack.c.b16 %v141, %v140
    %v152 = vpack.c.b16 %v143, %v142
    %v153 = vpack.c.b16 %v145, %v144
    %v178 = vunpack.c.l.b16 %v98
    %v179 = vunpack.c.l.b16 %v99
    %v180 = vunpack.c.l.b16 %v100
    %v181 = vunpack.c.l.b16 %v101
    %v182 = vunpack.c.l.b16 %v102
    %v183 = vunpack.c.l.b16 %v103
    %v184 = vunpack.c.l.b16 %v104
    %v185 = vunpack.c.l.b16 %v105
    %v186 = vunpack.c.l.b16 %v106
    %v187 = vunpack.c.l.b16 %v107
    %v188 = vunpack.c.l.b16 %v108
    %v189 = vunpack.c.l.b16 %v109
    %v190 = vunpack.c.l.b16 %v110
    %v191 = vunpack.c.l.b16 %v111
    %v192 = vunpack.c.l.b16 %v112
    %v193 = vunpack.c.l.b16 %v113
    %v194 = vpack.c.b16 %v179, %v178
    %v195 = vpack.c.b16 %v181, %v180
    %v196 = vpack.c.b16 %v183, %v182
    %v197 = vpack.c.b16 %v185, %v184
    %v198 = vpack.c.b16 %v187, %v186
    %v199 = vpack.c.b16 %v189, %v188
    %v200 = vpack.c.b16 %v191, %v190
    %v201 = vpack.c.b16 %v193, %v192
    %210 = vmatprep.subr.bf16.mxu0 0
    %211 = vmatpush1.bf16.msra.mxu0 %v201
    %212 = vmatprep.subr.bf16.mxu0 0
    %213 = vmatpush1.bf16.msra.mxu0 %v200
    %214 = vmatprep.subr.bf16.mxu0 0
    %215 = vmatpush1.bf16.msra.mxu0 %v199
    %216 = vmatprep.subr.bf16.mxu0 0
    %217 = vmatpush1.bf16.msra.mxu0 %v198
    %218 = vmatprep.subr.bf16.mxu0 0
    %219 = vmatpush1.bf16.msra.mxu0 %v197
    %220 = vmatprep.subr.bf16.mxu0 0
    %221 = vmatpush1.bf16.msra.mxu0 %v196
    %222 = vmatprep.subr.bf16.mxu0 0
    %223 = vmatpush1.bf16.msra.mxu0 %v195
    %224 = vmatprep.subr.bf16.mxu0 0
    %225 = vmatpush1.bf16.msra.mxu0 %v194
    %226 = vmatprep.subr.bf16.mxu0 0
    %227 = vmatpush2.bf16.msra.mxu0 0
    %228 = vmatprep.subr.bf16.mxu0 0
    %229 = vmatpush2.bf16.msra.mxu0 0
    %230 = vmatprep.subr.bf16.mxu0 0
    %231 = vmatpush2.bf16.msra.mxu0 0
    %232 = vmatprep.subr.bf16.mxu0 0
    %233 = vmatpush2.bf16.msra.mxu0 0
    %234 = vmatprep.subr.bf16.mxu0 0
    %235 = vmatpush2.bf16.msra.mxu0 0
    %236 = vmatprep.subr.bf16.mxu0 0
    %237 = vmatpush2.bf16.msra.mxu0 0
    %238 = vmatprep.subr.bf16.mxu0 0
    %239 = vmatpush2.bf16.msra.mxu0 0
    %240 = vmatprep.subr.bf16.mxu0 0
    %241 = vmatpush2.bf16.msra.mxu0 0
    %242 = vmatprep.mubr.bf16.mxu0 0
    %243 = vmatmul.mubr.bf16.gmra.mxu0 %v146
    %v244 = vpop.f32.mrf.mxu0
    %v245 = vadd.f32 0.0, %v244
    %v246 = vpop.f32.mrf.mxu0
    %v247 = vpop.f32.mrf.mxu0
    %v248 = vadd.f32 0.0, %v247
    %v249 = vpop.f32.mrf.mxu0
    %250 = vmatprep.mubr.bf16.mxu0 0
    %251 = vmatmul.mubr.bf16.gmra.mxu0 %v147
    %v252 = vpop.f32.mrf.mxu0
    %v253 = vadd.f32 0.0, %v252
    %v254 = vpop.f32.mrf.mxu0
    %v255 = vpop.f32.mrf.mxu0
    %v256 = vadd.f32 0.0, %v255
    %v257 = vpop.f32.mrf.mxu0
    %258 = vmatprep.mubr.bf16.mxu0 0
    %259 = vmatmul.mubr.bf16.gmra.mxu0 %v148
    %v260 = vpop.f32.mrf.mxu0
    %v261 = vadd.f32 0.0, %v260
    %v262 = vpop.f32.mrf.mxu0
    %v263 = vpop.f32.mrf.mxu0
    %v264 = vadd.f32 0.0, %v263
    %v265 = vpop.f32.mrf.mxu0
    %266 = vmatprep.mubr.bf16.mxu0 0
    %267 = vmatmul.mubr.bf16.gmra.mxu0 %v149
    %v268 = vpop.f32.mrf.mxu0
    %v269 = vadd.f32 0.0, %v268
    %v270 = vpop.f32.mrf.mxu0
    %v271 = vpop.f32.mrf.mxu0
    %v272 = vadd.f32 0.0, %v271
    %v273 = vpop.f32.mrf.mxu0
    %274 = vmatprep.mubr.bf16.mxu0 0
    %275 = vmatmul.mubr.bf16.gmra.mxu0 %v150
    %v276 = vpop.f32.mrf.mxu0
    %v277 = vadd.f32 0.0, %v276
    %v278 = vpop.f32.mrf.mxu0
    %v279 = vpop.f32.mrf.mxu0
    %v280 = vadd.f32 0.0, %v279
    %v281 = vpop.f32.mrf.mxu0
    %282 = vmatprep.mubr.bf16.mxu0 0
    %283 = vmatmul.mubr.bf16.gmra.mxu0 %v151
    %v284 = vpop.f32.mrf.mxu0
    %v285 = vadd.f32 0.0, %v284
    %v286 = vpop.f32.mrf.mxu0
    %v287 = vpop.f32.mrf.mxu0
    %v288 = vadd.f32 0.0, %v287
    %v289 = vpop.f32.mrf.mxu0
    %290 = vmatprep.mubr.bf16.mxu0 0
    %291 = vmatmul.mubr.bf16.gmra.mxu0 %v152
    %v292 = vpop.f32.mrf.mxu0
    %v293 = vadd.f32 0.0, %v292
    %v294 = vpop.f32.mrf.mxu0
    %v295 = vpop.f32.mrf.mxu0
    %v296 = vadd.f32 0.0, %v295
    %v297 = vpop.f32.mrf.mxu0
    %298 = vmatprep.mubr.bf16.mxu0 0
    %299 = vmatmul.mubr.bf16.gmra.mxu0 %v153
    %v300 = vpop.f32.mrf.mxu0
    %v301 = vadd.f32 0.0, %v300
    %v302 = vpop.f32.mrf.mxu0
    %v303 = vpop.f32.mrf.mxu0
    %v304 = vadd.f32 0.0, %v303
    %v305 = vpop.f32.mrf.mxu0
    %306 = vdwg.mxu0
    %v307 = vadd.f32 %v66, %v245
    %v308 = vadd.f32 %v67, %v248
    %v309 = vadd.f32 %v68, %v253
    %v310 = vadd.f32 %v69, %v256
    %v311 = vadd.f32 %v70, %v261
    %v312 = vadd.f32 %v71, %v264
    %v313 = vadd.f32 %v72, %v269
    %v314 = vadd.f32 %v73, %v272
    %v315 = vadd.f32 %v74, %v277
    %v316 = vadd.f32 %v75, %v280
    %v317 = vadd.f32 %v76, %v285
    %v318 = vadd.f32 %v77, %v288
    %v319 = vadd.f32 %v78, %v293
    %v320 = vadd.f32 %v79, %v296
    %v321 = vadd.f32 %v80, %v301
    %v322 = vadd.f32 %v81, %v304
    %323 = vst [vmem:[#allocation2] sm:$0xff] %v307
    %324 = vst [vmem:[#allocation2 + $0x8] sm:$0xff] %v308
    %325 = vst [vmem:[#allocation2 + $0x10] sm:$0xff] %v309
    %326 = vst [vmem:[#allocation2 + $0x18] sm:$0xff] %v310
    %327 = vst [vmem:[#allocation2 + $0x20] sm:$0xff] %v311
    %328 = vst [vmem:[#allocation2 + $0x28] sm:$0xff] %v312
    %329 = vst [vmem:[#allocation2 + $0x30] sm:$0xff] %v313
    %330 = vst [vmem:[#allocation2 + $0x38] sm:$0xff] %v314
    %331 = vst [vmem:[#allocation2 + $0x40] sm:$0xff] %v315
    %332 = vst [vmem:[#allocation2 + $0x48] sm:$0xff] %v316
    %333 = vst [vmem:[#allocation2 + $0x50] sm:$0xff] %v317
    %334 = vst [vmem:[#allocation2 + $0x58] sm:$0xff] %v318
    %335 = vst [vmem:[#allocation2 + $0x60] sm:$0xff] %v319
    %336 = vst [vmem:[#allocation2 + $0x68] sm:$0xff] %v320
    %337 = vst [vmem:[#allocation2 + $0x70] sm:$0xff] %v321
    %338 = vst [vmem:[#allocation2 + $0x78] sm:$0xff] %v322
    // Predicated region
    $region26: #{tpu_custom_call.1} parent=1 // pred_check
      _
    $region27: #{tpu_custom_call.1} parent=1 // pred_check_branch
      %340 = sbr.rel (%p46) target = $region29
    $region28: #{tpu_custom_call.1} parent=1 // pred_region
      %v341 = vld [vmem:[#allocation2] sm:$0xff]
      %v342 = vld [vmem:[#allocation2 + $0x8] sm:$0xff]
      %v343 = vld [vmem:[#allocation2 + $0x10] sm:$0xff]
      %v344 = vld [vmem:[#allocation2 + $0x18] sm:$0xff]
      %v345 = vld [vmem:[#allocation2 + $0x20] sm:$0xff]
      %v346 = vld [vmem:[#allocation2 + $0x28] sm:$0xff]
      %v347 = vld [vmem:[#allocation2 + $0x30] sm:$0xff]
      %v348 = vld [vmem:[#allocation2 + $0x38] sm:$0xff]
      %v349 = vld [vmem:[#allocation2 + $0x40] sm:$0xff]
      %v350 = vld [vmem:[#allocation2 + $0x48] sm:$0xff]
      %v351 = vld [vmem:[#allocation2 + $0x50] sm:$0xff]
      %v352 = vld [vmem:[#allocation2 + $0x58] sm:$0xff]
      %v353 = vld [vmem:[#allocation2 + $0x60] sm:$0xff]
      %v354 = vld [vmem:[#allocation2 + $0x68] sm:$0xff]
      %v355 = vld [vmem:[#allocation2 + $0x70] sm:$0xff]
      %v356 = vld [vmem:[#allocation2 + $0x78] sm:$0xff]
      %v357 = vld [vmem:[%s2] sm:$0x1]
      %v359 = vlaneseq
      %v360 = vshrl.u32 %v359, 7
      %v361 = vsub.s32 0, %v360
      %v362 = vrot.slane %v357, %v361
      %v364 = vadd.f32 %v341, %v362
      %v365 = vadd.f32 %v342, %v362
      %v366 = vadd.f32 %v343, %v362
      %v367 = vadd.f32 %v344, %v362
      %v368 = vadd.f32 %v345, %v362
      %v369 = vadd.f32 %v346, %v362
      %v370 = vadd.f32 %v347, %v362
      %v371 = vadd.f32 %v348, %v362
      %v372 = vadd.f32 %v349, %v362
      %v373 = vadd.f32 %v350, %v362
      %v374 = vadd.f32 %v351, %v362
      %v375 = vadd.f32 %v352, %v362
      %v376 = vadd.f32 %v353, %v362
      %v377 = vadd.f32 %v354, %v362
      %v378 = vadd.f32 %v355, %v362
      %v379 = vadd.f32 %v356, %v362
      %v380 = vmax.f32 %v364, 0.0
      %v381 = vmax.f32 %v365, 0.0
      %v382 = vmax.f32 %v366, 0.0
      %v383 = vmax.f32 %v367, 0.0
      %v384 = vmax.f32 %v368, 0.0
      %v385 = vmax.f32 %v369, 0.0
      %v386 = vmax.f32 %v370, 0.0
      %v387 = vmax.f32 %v371, 0.0
      %v388 = vmax.f32 %v372, 0.0
      %v389 = vmax.f32 %v373, 0.0
      %v390 = vmax.f32 %v374, 0.0
      %v391 = vmax.f32 %v375, 0.0
      %v392 = vmax.f32 %v376, 0.0
      %v393 = vmax.f32 %v377, 0.0
      %v394 = vmax.f32 %v378, 0.0
      %v395 = vmax.f32 %v379, 0.0
      %v396 = vpack.c.bf16 %v381, %v380
      %v397 = vpack.c.bf16 %v383, %v382
      %v398 = vpack.c.bf16 %v385, %v384
      %v399 = vpack.c.bf16 %v387, %v386
      %v400 = vpack.c.bf16 %v389, %v388
      %v401 = vpack.c.bf16 %v391, %v390
      %v402 = vpack.c.bf16 %v393, %v392
      %v403 = vpack.c.bf16 %v395, %v394
      %v412 = vunpack.c.l.b16 %v396
      %v413 = vunpack.c.h.b16 %v396
      %v414 = vunpack.c.l.b16 %v397
      %v415 = vunpack.c.h.b16 %v397
      %v416 = vunpack.c.l.b16 %v398
      %v417 = vunpack.c.h.b16 %v398
      %v418 = vunpack.c.l.b16 %v399
      %v419 = vunpack.c.h.b16 %v399
      %v420 = vunpack.c.l.b16 %v400
      %v421 = vunpack.c.h.b16 %v400
      %v422 = vunpack.c.l.b16 %v401
      %v423 = vunpack.c.h.b16 %v401
      %v424 = vunpack.c.l.b16 %v402
      %v425 = vunpack.c.h.b16 %v402
      %v426 = vunpack.c.l.b16 %v403
      %v427 = vunpack.c.h.b16 %v403
      %v428 = vpack.c.b16 %v412, %v412
      %v429 = vpack.c.b16 %v413, %v413
      %v430 = vpack.c.b16 %v414, %v414
      %v431 = vpack.c.b16 %v415, %v415
      %v432 = vpack.c.b16 %v416, %v416
      %v433 = vpack.c.b16 %v417, %v417
      %v434 = vpack.c.b16 %v418, %v418
      %v435 = vpack.c.b16 %v419, %v419
      %v436 = vpack.c.b16 %v420, %v420
      %v437 = vpack.c.b16 %v421, %v421
      %v438 = vpack.c.b16 %v422, %v422
      %v439 = vpack.c.b16 %v423, %v423
      %v440 = vpack.c.b16 %v424, %v424
      %v441 = vpack.c.b16 %v425, %v425
      %v442 = vpack.c.b16 %v426, %v426
      %v443 = vpack.c.b16 %v427, %v427
      %460 = vst [vmem:[#allocation8] sm:$0xf] %v428
      %461 = vst [vmem:[#allocation8 + $0x4] sm:$0xf] %v429
      %462 = vst [vmem:[#allocation8 + $0x8] sm:$0xf] %v430
      %463 = vst [vmem:[#allocation8 + $0xc] sm:$0xf] %v431
      %464 = vst [vmem:[#allocation8 + $0x10] sm:$0xf] %v432
      %465 = vst [vmem:[#allocation8 + $0x14] sm:$0xf] %v433
      %466 = vst [vmem:[#allocation8 + $0x18] sm:$0xf] %v434
      %467 = vst [vmem:[#allocation8 + $0x1c] sm:$0xf] %v435
      %468 = vst [vmem:[#allocation8 + $0x20] sm:$0xf] %v436
      %469 = vst [vmem:[#allocation8 + $0x24] sm:$0xf] %v437
      %470 = vst [vmem:[#allocation8 + $0x28] sm:$0xf] %v438
      %471 = vst [vmem:[#allocation8 + $0x2c] sm:$0xf] %v439
      %472 = vst [vmem:[#allocation8 + $0x30] sm:$0xf] %v440
      %473 = vst [vmem:[#allocation8 + $0x34] sm:$0xf] %v441
      %474 = vst [vmem:[#allocation8 + $0x38] sm:$0xf] %v442
      %475 = vst [vmem:[#allocation8 + $0x3c] sm:$0xf] %v443
    $region29: #{tpu_custom_call.1} parent=1 // pred_fallthru
      _
    // Predicated region
    $region30: #{tpu_custom_call.1} parent=1 // pred_check
      _
    $region31: #{tpu_custom_call.1} parent=1 // pred_check_branch
      %477 = sbr.rel (0) target = $region33
    $region32: #{tpu_custom_call.1} parent=1 // pred_region
      %s479 = ssub.s32 1024, 1024
      %480 = vsyncadd [#allocation5], %s479
      %s481 = sshll.u32 [#allocation8], 4
      %s482 = int_to_ptr.vmem [resolvable:$true] %s481
      %487 = dma.vmem_to_hbm [thread:$0]  %s482, 1024, %s3, [#allocation5], 64, 64, 4
    $region33: #{tpu_custom_call.1} parent=1 // pred_fallthru
      _
    // Predicated region
    $region34: #{tpu_custom_call.1} parent=1 // pred_check
      _
    $region35: #{tpu_custom_call.1} parent=1 // pred_check_branch
      %489 = sbr.rel (0) target = $region37
    $region36: #{tpu_custom_call.1} parent=1 // pred_region
      %490 = dma.done [#allocation5], 1024
    $region37: #{tpu_custom_call.1} parent=1 // pred_fallthru
      _
    %491 = vsyncpa [#allocation4], 1
    %492 = vsyncpa [#allocation7], 1
    %493 = vsyncpa [#allocation5], 1

</llo_original>
